<compile_context>
chip_gen: v7x
topology: tpu7x:2x2x1
jax: 0.10.0
libtpu: 0.0.40
codegen_flags: <defaults>
</compile_context>

<pallas_src>
import functools

import jax
import jax.numpy as jnp
from jax import lax
from jax.experimental import pallas as pl
from jax.experimental.pallas import tpu as pltpu

_BLOCK_BYTES = 8 * 1024 * 1024   # per-step input block (double-buffered -> 16 MiB)
_MAX_GROUPS = 16                 # inner accumulation groups per block (fully unrolled)
_VMEM_LIMIT = 40 * 1024 * 1024   # scoped-VMEM: safe on v5e/v6e (128 MiB) and v7x (64 MiB)


def _cdiv(a: int, b: int) -> int:
    return -(-a // b)


def _round_up(a: int, b: int) -> int:
    return _cdiv(a, b) * b


def _sumsq_kernel(x_ref, o_ref, *, n_rows, tile_rows, group_rows, ragged):
    """Accumulate sum-of-squares of x_ref into the resident (group_rows, D) f32 block."""
    step = pl.program_id(0)

    @pl.when(step == 0)
    def _():
        o_ref[...] = jnp.zeros_like(o_ref)

    n_groups = tile_rows // group_rows

    def body(g, carry):
        r0 = pl.multiple_of(g * group_rows, group_rows)
        x = x_ref[pl.ds(r0, group_rows), :].astype(jnp.float32)
        if ragged:
            # Zero rows past the true row count (OOB rows of the edge block are garbage).
            row0 = step * tile_rows + g * group_rows
            local = lax.broadcasted_iota(jnp.int32, (group_rows, 1), 0)
            x = jnp.where(row0 + local < n_rows, x, 0.0)
        o_ref[...] += x * x   # pure VPU multiply-add into the small resident accumulator
        return carry

    lax.fori_loop(0, n_groups, body, 0, unroll=True)


def _factor_sum_of_squares(factor: jax.Array) -> jax.Array:
    """Sum of squares of one 2-D factor via a single pallas_call (no staging copies)."""
    n, d = factor.shape
    itemsize = factor.dtype.itemsize
    sublane = max(8, 32 // itemsize)          # 8 f32 / 16 bf16 / 32 int8

    # Row budget for an ~8 MiB input block (dtype-aware), multiple of the sublane packing.
    budget_rows = max(sublane, (_BLOCK_BYTES // max(1, d * itemsize)) // sublane * sublane)
    tile_rows = min(budget_rows, _round_up(n, sublane))
    # Split each block into <= _MAX_GROUPS accumulation groups (bounds f32 temporaries).
    group_rows = _round_up(_cdiv(tile_rows, _MAX_GROUPS), sublane)
    tile_rows = _round_up(tile_rows, group_rows)

    grid = _cdiv(n, tile_rows)
    ragged = (grid * tile_rows) != n

    kernel = functools.partial(
        _sumsq_kernel,
        n_rows=n, tile_rows=tile_rows, group_rows=group_rows, ragged=ragged,
    )

    partials = pl.pallas_call(
        kernel,
        out_shape=jax.ShapeDtypeStruct((group_rows, d), jnp.float32),
        grid_spec=pltpu.PrefetchScalarGridSpec(
            num_scalar_prefetch=0,
            grid=(grid,),
            in_specs=[pl.BlockSpec((tile_rows, d), lambda i: (i, 0))],
            out_specs=pl.BlockSpec((group_rows, d), lambda i: (0, 0)),
        ),
        compiler_params=pltpu.CompilerParams(
            dimension_semantics=("arbitrary",),
            vmem_limit_bytes=_VMEM_LIMIT,
        ),
    )(factor)

    return jnp.sum(partials)


@jax.jit
def _fro_forward(factors, weight):
    total = jnp.float32(0.0)
    for f in factors:                         # one bandwidth-optimal kernel per factor
        total = total + _factor_sum_of_squares(f)
    # Torch: factors[0][0].shape[0] == number of columns of the first factor.
    denom = factors[0].shape[1]
    return (weight * total) / denom


def fro_regularizer(factors, weight: float) -> jax.Array:
    """JAX/Pallas equivalent of Fro(weight).forward(factors)."""
    return _fro_forward(tuple(factors), jnp.float32(weight))


def _reference(factors, weight: float) -> jax.Array:
    total = jnp.float32(0.0)
    for factor in factors:
        total = total + jnp.sum(factor.astype(jnp.float32) ** 2)
    return (weight * total) / factors[0].shape[1]


if __name__ == "__main__":
    key = jax.random.PRNGKey(0)
    k1, k2, k3 = jax.random.split(key, 3)

    # Small deterministic "factors" (e.g. lhs / rel / rhs embeddings).
    N, D = 16, 32
    factors = (
        jax.random.normal(k1, (N, D), dtype=jnp.float32),
        jax.random.normal(k2, (N, D), dtype=jnp.float32),
        jax.random.normal(k3, (N, D), dtype=jnp.float32),
    )
    weight = 0.05

    out = jax.block_until_ready(fro_regularizer(factors, weight))
    ref = _reference(factors, weight)
    assert jnp.allclose(out, ref, rtol=1e-5, atol=1e-5), (out, ref)

    # Odd (non 8/128-aligned) shapes + bf16 storage exercise the ragged-row masking,
    # bf16 sublane (16) alignment and in-kernel f32 cast paths.
    k4, k5 = jax.random.split(k3)
    factors_bf16 = (
        jax.random.normal(k4, (37, 20), dtype=jnp.bfloat16),
        jax.random.normal(k5, (37, 20), dtype=jnp.bfloat16),
    )
    out2 = jax.block_until_ready(fro_regularizer(factors_bf16, 0.1))
    ref2 = _reference(factors_bf16, 0.1)
    assert jnp.allclose(out2, ref2, rtol=1e-4, atol=1e-5), (out2, ref2)

    print("KERNEL_OK")
</pallas_src>

<mosaic_0001>
module attributes {stable_mosaic.version = 11 : i64} {
  func.func @_sumsq_kernel(%arg0: i32, %arg1: memref<16x32xf32, #tpu.memory_space<vmem>>, %arg2: memref<8x32xf32, #tpu.memory_space<vmem>>) attributes {dimension_semantics = [#tpu.dimension_semantics<arbitrary>], iteration_bounds = array<i64: 1>, scalar_prefetch = 0 : i64, scratch_operands = 0 : i64, tpu.core_type = #tpu.core_type<tc>, window_params = [{transform_indices = @transform_0, window_bounds = array<i64: 16, 32>}, {pipeline_mode = #tpu.pipeline_mode<synchronous>, transform_indices = @transform_1, window_bounds = array<i64: 8, 32>}]} {
    %c0_i32 = arith.constant 0 : i32
    %0 = arith.cmpi eq, %arg0, %c0_i32 : i32
    %1 = arith.extui %0 : i1 to i32
    %c0_i32_0 = arith.constant 0 : i32
    %2 = arith.cmpi ne, %1, %c0_i32_0 : i32
    scf.if %2 {
      %cst = arith.constant 0.000000e+00 : f32
      %19 = vector.broadcast %cst : f32 to vector<8x32xf32>
      %c0_12 = arith.constant 0 : index
      %c0_13 = arith.constant 0 : index
      %20 = vector.load %arg2[%c0_12, %c0_13] : memref<8x32xf32, #tpu.memory_space<vmem>>, vector<8x32xf32>
      tpu.vector_store %arg2[%c0_12, %c0_13], %19 {strides = array<i32>} : memref<8x32xf32, #tpu.memory_space<vmem>>, vector<8x32xf32>,
    } else {
    }
    %c0_i32_1 = arith.constant 0 : i32
    %c8_i32 = arith.constant 8 : i32
    %3 = arith.muli %c0_i32_1, %c8_i32 : i32
    %4 = tpu.assume_multiple %3, 8 : i32
    %5 = arith.index_cast %4 : i32 to index
    %c0 = arith.constant 0 : index
    %6 = vector.load %arg1[%5, %c0] : memref<16x32xf32, #tpu.memory_space<vmem>>, vector<8x32xf32>
    %c0_2 = arith.constant 0 : index
    %c0_3 = arith.constant 0 : index
    %7 = vector.load %arg2[%c0_2, %c0_3] : memref<8x32xf32, #tpu.memory_space<vmem>>, vector<8x32xf32>
    %8 = arith.mulf %6, %6 : vector<8x32xf32>
    %9 = arith.addf %7, %8 : vector<8x32xf32>
    %c0_4 = arith.constant 0 : index
    %c0_5 = arith.constant 0 : index
    %10 = vector.load %arg2[%c0_4, %c0_5] : memref<8x32xf32, #tpu.memory_space<vmem>>, vector<8x32xf32>
    tpu.vector_store %arg2[%c0_4, %c0_5], %9 {strides = array<i32>} : memref<8x32xf32, #tpu.memory_space<vmem>>, vector<8x32xf32>,
    %c1_i32 = arith.constant 1 : i32
    %c8_i32_6 = arith.constant 8 : i32
    %11 = arith.muli %c1_i32, %c8_i32_6 : i32
    %12 = tpu.assume_multiple %11, 8 : i32
    %13 = arith.index_cast %12 : i32 to index
    %c0_7 = arith.constant 0 : index
    %14 = vector.load %arg1[%13, %c0_7] : memref<16x32xf32, #tpu.memory_space<vmem>>, vector<8x32xf32>
    %c0_8 = arith.constant 0 : index
    %c0_9 = arith.constant 0 : index
    %15 = vector.load %arg2[%c0_8, %c0_9] : memref<8x32xf32, #tpu.memory_space<vmem>>, vector<8x32xf32>
    %16 = arith.mulf %14, %14 : vector<8x32xf32>
    %17 = arith.addf %15, %16 : vector<8x32xf32>
    %c0_10 = arith.constant 0 : index
    %c0_11 = arith.constant 0 : index
    %18 = vector.load %arg2[%c0_10, %c0_11] : memref<8x32xf32, #tpu.memory_space<vmem>>, vector<8x32xf32>
    tpu.vector_store %arg2[%c0_10, %c0_11], %17 {strides = array<i32>} : memref<8x32xf32, #tpu.memory_space<vmem>>, vector<8x32xf32>,
    %c2_i32 = arith.constant 2 : i32
    return
  }
  func.func @transform_0(%arg0: i32) -> (i32, i32) {
    %c0_i32 = arith.constant 0 : i32
    %c0_i32_0 = arith.constant 0 : i32
    return %arg0, %c0_i32 : i32, i32
  }
  func.func @transform_1(%arg0: i32) -> (i32, i32) {
    %c0_i32 = arith.constant 0 : i32
    %c0_i32_0 = arith.constant 0 : i32
    %c0_i32_1 = arith.constant 0 : i32
    return %c0_i32, %c0_i32_0 : i32, i32
  }
}

module attributes {stable_mosaic.version = 11 : i64} {
  func.func @_sumsq_kernel(%arg0: i32, %arg1: memref<16x32xf32, #tpu.memory_space<vmem>>, %arg2: memref<8x32xf32, #tpu.memory_space<vmem>>) attributes {dimension_semantics = [#tpu.dimension_semantics<arbitrary>], iteration_bounds = array<i64: 1>, scalar_prefetch = 0 : i64, scratch_operands = 0 : i64, tpu.core_type = #tpu.core_type<tc>, window_params = [{transform_indices = @transform_0, window_bounds = array<i64: 16, 32>}, {pipeline_mode = #tpu.pipeline_mode<synchronous>, transform_indices = @transform_1, window_bounds = array<i64: 8, 32>}]} {
    %c0_i32 = arith.constant 0 : i32
    %0 = arith.cmpi eq, %arg0, %c0_i32 : i32
    %1 = arith.extui %0 : i1 to i32
    %c0_i32_0 = arith.constant 0 : i32
    %2 = arith.cmpi ne, %1, %c0_i32_0 : i32
    scf.if %2 {
      %cst = arith.constant 0.000000e+00 : f32
      %19 = vector.broadcast %cst : f32 to vector<8x32xf32>
      %c0_12 = arith.constant 0 : index
      %c0_13 = arith.constant 0 : index
      %20 = vector.load %arg2[%c0_12, %c0_13] : memref<8x32xf32, #tpu.memory_space<vmem>>, vector<8x32xf32>
      tpu.vector_store %arg2[%c0_12, %c0_13], %19 {strides = array<i32>} : memref<8x32xf32, #tpu.memory_space<vmem>>, vector<8x32xf32>,
    } else {
    }
    %c0_i32_1 = arith.constant 0 : i32
    %c8_i32 = arith.constant 8 : i32
    %3 = arith.muli %c0_i32_1, %c8_i32 : i32
    %4 = tpu.assume_multiple %3, 8 : i32
    %5 = arith.index_cast %4 : i32 to index
    %c0 = arith.constant 0 : index
    %6 = vector.load %arg1[%5, %c0] : memref<16x32xf32, #tpu.memory_space<vmem>>, vector<8x32xf32>
    %c0_2 = arith.constant 0 : index
    %c0_3 = arith.constant 0 : index
    %7 = vector.load %arg2[%c0_2, %c0_3] : memref<8x32xf32, #tpu.memory_space<vmem>>, vector<8x32xf32>
    %8 = arith.mulf %6, %6 : vector<8x32xf32>
    %9 = arith.addf %7, %8 : vector<8x32xf32>
    %c0_4 = arith.constant 0 : index
    %c0_5 = arith.constant 0 : index
    %10 = vector.load %arg2[%c0_4, %c0_5] : memref<8x32xf32, #tpu.memory_space<vmem>>, vector<8x32xf32>
    tpu.vector_store %arg2[%c0_4, %c0_5], %9 {strides = array<i32>} : memref<8x32xf32, #tpu.memory_space<vmem>>, vector<8x32xf32>,
    %c1_i32 = arith.constant 1 : i32
    %c8_i32_6 = arith.constant 8 : i32
    %11 = arith.muli %c1_i32, %c8_i32_6 : i32
    %12 = tpu.assume_multiple %11, 8 : i32
    %13 = arith.index_cast %12 : i32 to index
    %c0_7 = arith.constant 0 : index
    %14 = vector.load %arg1[%13, %c0_7] : memref<16x32xf32, #tpu.memory_space<vmem>>, vector<8x32xf32>
    %c0_8 = arith.constant 0 : index
    %c0_9 = arith.constant 0 : index
    %15 = vector.load %arg2[%c0_8, %c0_9] : memref<8x32xf32, #tpu.memory_space<vmem>>, vector<8x32xf32>
    %16 = arith.mulf %14, %14 : vector<8x32xf32>
    %17 = arith.addf %15, %16 : vector<8x32xf32>
    %c0_10 = arith.constant 0 : index
    %c0_11 = arith.constant 0 : index
    %18 = vector.load %arg2[%c0_10, %c0_11] : memref<8x32xf32, #tpu.memory_space<vmem>>, vector<8x32xf32>
    tpu.vector_store %arg2[%c0_10, %c0_11], %17 {strides = array<i32>} : memref<8x32xf32, #tpu.memory_space<vmem>>, vector<8x32xf32>,
    %c2_i32 = arith.constant 2 : i32
    return
  }
  func.func @transform_0(%arg0: i32) -> (i32, i32) {
    %c0_i32 = arith.constant 0 : i32
    %c0_i32_0 = arith.constant 0 : i32
    return %arg0, %c0_i32 : i32, i32
  }
  func.func @transform_1(%arg0: i32) -> (i32, i32) {
    %c0_i32 = arith.constant 0 : i32
    %c0_i32_0 = arith.constant 0 : i32
    %c0_i32_1 = arith.constant 0 : i32
    return %c0_i32, %c0_i32_0 : i32, i32
  }
}

</mosaic_0001>

<llo_original>
// kernel: _fro_forward.3
$region0: #{_fro_forward.3}
  #allocation0 [shape = 'u32[]', space=smem, size = 0x4, offset = 0x4, fixed_abs, tag = 'smem constant byte address 0x4 - core index']
  #allocation1 [shape = 'u32[144,128]{1,0:T(1,128)}', space=vmem, size = 0x12000, scoped, tag = 'internal scratch']
  %s0 = inlined_call_operand.hbm [shape: f32[16,32], index: 0, kind: input, shape index: {}]
  %s1 = inlined_call_operand.vmem [shape: f32[8,32], index: 1, kind: output, shape index: {}]
  %s2 = sld [smem:[#allocation0]]
  $region22: #{_fro_forward.3} parent=0
    _
  %s4 = ssub.s32 1, %s2
  %s5 = scalar_select 0, %s4, %s2
  $region1: #{_fro_forward.3} parent=0
    #allocation2 [shape = 'u8[8192]{0}', space=vmem, size = 0x2000, scoped, tag = 'input window, operand 0, single buffered']
    #allocation3 [shape = 's32[1]{0}', space=sflag, size = 0x4, scoped, tag = 'scoped memory for _fro_forward.3']
    %6 = vsyncpa [#allocation3], 0
    // Predicated region
    $region2: #{_fro_forward.3} parent=1 // pred_check
      _
    $region3: #{_fro_forward.3} parent=1 // pred_check_branch
      %8 = sbr.rel (0) target = $region5
    $region4: #{_fro_forward.3} parent=1 // pred_region
      %s10 = ssub.s32 256, 256
      %11 = vsyncadd [#allocation3], %s10
      %s12 = sshll.u32 [#allocation2], 4
      %s13 = int_to_ptr.vmem [resolvable:$true] %s12
      %18 = dma.hbm_to_vmem [thread:$0]  %s0, 256, %s13, [#allocation3], 128, 128, 8
    $region5: #{_fro_forward.3} parent=1 // pred_fallthru
      _
    // Predicated region
    $region6: #{_fro_forward.3} parent=1 // pred_check
      _
    $region7: #{_fro_forward.3} parent=1 // pred_check_branch
      %20 = sbr.rel (0) target = $region9
    $region8: #{_fro_forward.3} parent=1 // pred_region
      %21 = dma.done [#allocation3], 256
    $region9: #{_fro_forward.3} parent=1 // pred_fallthru
      _
    %p22 = scmp.eq.s32.totalorder 0, 0
    // Predicated region
    $region10: #{_fro_forward.3} parent=1 // pred_check
      %p23 = pneg %p22
    $region11: #{_fro_forward.3} parent=1 // pred_check_branch
      %25 = sbr.rel (%p23) target = $region13
    $region12: #{_fro_forward.3} parent=1 // pred_region
      %vm26 = vcmask 261120
      %27 = vst.msk [vmem:[%s1] sm:$0xff] %vm26, 0.0
    $region13: #{_fro_forward.3} parent=1 // pred_fallthru
      _
    %v28 = vld [vmem:[#allocation2] sm:$0xff]
    %v29 = vld [vmem:[%s1] sm:$0xff]
    %v30 = vmul.f32 %v28, %v28
    %v31 = vadd.f32 %v29, %v30
    %vm32 = vcmask 261120
    %33 = vst.msk [vmem:[%s1] sm:$0xff] %vm32, %v31
    %s34 = scalar_lea.vmem [#allocation2], 8
    %v35 = vld [vmem:[%s34] sm:$0xff]
    %v36 = vld [vmem:[%s1] sm:$0xff]
    %v37 = vmul.f32 %v35, %v35
    %v38 = vadd.f32 %v36, %v37
    %39 = vst.msk [vmem:[%s1] sm:$0xff] %vm32, %v38
    // Predicated region
    $region14: #{_fro_forward.3} parent=1 // pred_check
      _
    $region15: #{_fro_forward.3} parent=1 // pred_check_branch
      %41 = sbr.rel (0) target = $region17
    $region16: #{_fro_forward.3} parent=1 // pred_region
      _
    $region17: #{_fro_forward.3} parent=1 // pred_fallthru
      _
    // Predicated region
    $region18: #{_fro_forward.3} parent=1 // pred_check
      _
    $region19: #{_fro_forward.3} parent=1 // pred_check_branch
      %43 = sbr.rel (0) target = $region21
    $region20: #{_fro_forward.3} parent=1 // pred_region
      _
    $region21: #{_fro_forward.3} parent=1 // pred_fallthru
      _
    %44 = vsyncpa [#allocation3], 1

// kernel: _fro_forward.4
$region0: #{_fro_forward.4}
  #allocation0 [shape = 'u32[]', space=smem, size = 0x4, offset = 0x4, fixed_abs, tag = 'smem constant byte address 0x4 - core index']
  #allocation1 [shape = 'u32[144,128]{1,0:T(1,128)}', space=vmem, size = 0x12000, scoped, tag = 'internal scratch']
  %s0 = inlined_call_operand.vmem [shape: f32[16,32], index: 0, kind: input, shape index: {}]
  %s1 = inlined_call_operand.vmem [shape: f32[8,32], index: 1, kind: output, shape index: {}]
  %s2 = sld [smem:[#allocation0]]
  $region18: #{_fro_forward.4} parent=0
    _
  %s4 = ssub.s32 1, %s2
  %s5 = scalar_select 0, %s4, %s2
  // Predicated region
  $region2: #{_fro_forward.4} parent=0 // pred_check
    _
  $region3: #{_fro_forward.4} parent=0 // pred_check_branch
    %7 = sbr.rel (0) target = $region5
  $region4: #{_fro_forward.4} parent=0 // pred_region
    _
  $region5: #{_fro_forward.4} parent=0 // pred_fallthru
    _
  %p8 = scmp.eq.s32.totalorder 0, 0
  // Predicated region
  $region6: #{_fro_forward.4} parent=0 // pred_check
    %p9 = pneg %p8
  $region7: #{_fro_forward.4} parent=0 // pred_check_branch
    %11 = sbr.rel (%p9) target = $region9
  $region8: #{_fro_forward.4} parent=0 // pred_region
    %vm12 = vcmask 261120
    %13 = vst.msk [vmem:[%s1] sm:$0xff] %vm12, 0.0
  $region9: #{_fro_forward.4} parent=0 // pred_fallthru
    _
  %v14 = vld [vmem:[%s0] sm:$0xff]
  %v15 = vld [vmem:[%s1] sm:$0xff]
  %v16 = vmul.f32 %v14, %v14
  %v17 = vadd.f32 %v15, %v16
  %vm18 = vcmask 261120
  %19 = vst.msk [vmem:[%s1] sm:$0xff] %vm18, %v17
  %s20 = scalar_lea.vmem %s0, 8
  %v21 = vld [vmem:[%s20] sm:$0xff]
  %v22 = vld [vmem:[%s1] sm:$0xff]
  %v23 = vmul.f32 %v21, %v21
  %v24 = vadd.f32 %v22, %v23
  %25 = vst.msk [vmem:[%s1] sm:$0xff] %vm18, %v24
  // Predicated region
  $region10: #{_fro_forward.4} parent=0 // pred_check
    _
  $region11: #{_fro_forward.4} parent=0 // pred_check_branch
    %27 = sbr.rel (0) target = $region13
  $region12: #{_fro_forward.4} parent=0 // pred_region
    _
  $region13: #{_fro_forward.4} parent=0 // pred_fallthru
    _
  // Predicated region
  $region14: #{_fro_forward.4} parent=0 // pred_check
    _
  $region15: #{_fro_forward.4} parent=0 // pred_check_branch
    %29 = sbr.rel (0) target = $region17
  $region16: #{_fro_forward.4} parent=0 // pred_region
    _
  $region17: #{_fro_forward.4} parent=0 // pred_fallthru
    _

</llo_original>
